<compile_context>
chip_gen: v6e
topology: v6e:2x2x1
jax: 0.10.0
libtpu: 0.0.40
codegen_flags: <defaults>
</compile_context>

<pallas_src>
import numpy as np
import jax
import jax.numpy as jnp
from jax import lax
from jax.experimental import pallas as pl
from jax.experimental.pallas import tpu as pltpu

_LANES = 128
_CHUNK = 512                 # inner compute chunk (lane axis): intermediates stay ~vreg-sized
_TD_CAP = 64 * 1024          # lane-axis block cap (elements; multiple of _CHUNK and 128)
_TARGET_ELEMS = 256 * 1024   # ~1 MiB of f32 input per grid step (per input)


def _cdiv(a, b):
    return -(-a // b)


def _round_up(x, m):
    return ((x + m - 1) // m) * m


def _choose_tiles(B, D):
    """Pick (tb, td) block dims: ~1-2 MiB per input per step, no wrapper padding."""
    # Lane-axis block: take the full feature dim when it fits (legal even if
    # not a multiple of 128, because block == full dim); otherwise a large
    # 128/512-aligned block with a ragged last block handled in-kernel.
    td = D if D <= _TD_CAP else _TD_CAP

    # Batch-axis block: multiple of 8 (sublane tiling), grown when D is small
    # so DMAs stay big, balanced across blocks to minimize row overhang.
    if B <= 8:
        tb = B                              # block == full dim: always legal
    else:
        tb_max = (B // 8) * 8
        desired = max(8, min(tb_max, (_TARGET_ELEMS // td) // 8 * 8))
        nb = _cdiv(B, desired)
        tb = min(tb_max, _round_up(_cdiv(B, nb), 8))
    return tb, td


def _make_kernel(tb, td, nk, last_width):
    """Build the kernel. `last_width` = valid lane columns in the final feature block."""

    def _contrib(x_raw, t_raw):
        x = x_raw.astype(jnp.float32)
        t = t_raw.astype(jnp.float32)
        # Stable softplus: L = softplus(x) = max(x,0) + log(1 + exp(-|x|))
        #   log(sigmoid(x))     = x - L
        #   log(1 - sigmoid(x)) = -L
        #   sigmoid(x)          = exp(x - L)
        # 3 EUP ops / element (exp, log, exp) instead of 4 (sigmoid + 2 logs).
        sp = jnp.maximum(x, 0.0) + jnp.log(1.0 + jnp.exp(-jnp.abs(x)))
        log_p = jnp.maximum(x - sp, -100.0)      # torch BCELoss clamps log at -100
        log_1mp = jnp.maximum(-sp, -100.0)
        p = jnp.exp(x - sp)                      # == sigmoid(x)
        pt = p * t
        ps = p + t
        bce = -(t * log_p + (1.0 - t) * log_1mp)
        return pt, ps, bce

    def _process(x_ref, t_ref, out_ref, width):
        # `width` is a static Python int: only valid columns are ever touched,
        # so the ragged last block needs no masks and reads no stale VMEM.
        n_full = width // _CHUNK
        rem = width - n_full * _CHUNK

        if n_full > 0:
            def body(j, carry):
                a_pt, a_ps, a_b = carry
                off = pl.multiple_of(j * _CHUNK, _CHUNK)
                pt, ps, b = _contrib(x_ref[:, pl.ds(off, _CHUNK)],
                                     t_ref[:, pl.ds(off, _CHUNK)])
                return a_pt + pt, a_ps + ps, a_b + b

            z = jnp.zeros((tb, _CHUNK), jnp.float32)
            a_pt, a_ps, a_b = lax.fori_loop(0, n_full, body, (z, z, z))
            inter = jnp.sum(a_pt, axis=1, keepdims=True)
            denom = jnp.sum(a_ps, axis=1, keepdims=True)
            bce = jnp.sum(a_b, axis=1, keepdims=True)
        else:
            inter = jnp.zeros((tb, 1), jnp.float32)
            denom = jnp.zeros((tb, 1), jnp.float32)
            bce = jnp.zeros((tb, 1), jnp.float32)

        if rem > 0:
            off = n_full * _CHUNK               # static
            pt, ps, b = _contrib(x_ref[:, pl.ds(off, rem)],
                                 t_ref[:, pl.ds(off, rem)])
            inter = inter + jnp.sum(pt, axis=1, keepdims=True)
            denom = denom + jnp.sum(ps, axis=1, keepdims=True)
            bce = bce + jnp.sum(b, axis=1, keepdims=True)

        # Lane-dense (tb, 128) output block: lanes 0/1/2 hold the per-row
        # partials (intersection, sum(p)+sum(t), bce sum) for this (i, k).
        lane = lax.broadcasted_iota(jnp.int32, (tb, _LANES), 1)
        out_ref[...] = jnp.where(lane == 0, inter,
                                 jnp.where(lane == 1, denom,
                                           jnp.where(lane == 2, bce, 0.0)))

    def kernel(x_ref, t_ref, out_ref):
        if last_width == td:
            # Feature dim tiles exactly: single code path, zero masking cost.
            _process(x_ref, t_ref, out_ref, td)
        else:
            k = pl.program_id(1)

            @pl.when(k < nk - 1)
            def _():
                _process(x_ref, t_ref, out_ref, td)

            @pl.when(k == nk - 1)
            def _():
                _process(x_ref, t_ref, out_ref, last_width)

    return kernel


def dice_bce_loss(x, target, bce_weight=0.5, dice_weight=0.5, smooth=1.0):
    """Pallas TPU implementation of Dice_BCE_Loss.forward(input, target)."""
    assert x.shape == target.shape
    B = x.shape[0]
    D = int(np.prod(x.shape[1:]))

    # Flatten per-sample dims; keep the native dtype (cast happens on-chip).
    # NOTE: no jnp.pad here -- ragged trailing blocks are handled in-kernel.
    x2 = x.reshape(B, D)
    t2 = target.reshape(B, D)

    tb, td = _choose_tiles(B, D)
    nb = _cdiv(B, tb)                    # batch blocks   ("parallel")
    nk = _cdiv(D, td)                    # feature blocks ("parallel": per-(i,k) partials)
    last_width = D - (nk - 1) * td       # valid columns in the final feature block

    kernel = _make_kernel(tb, td, nk, last_width)

    partials = pl.pallas_call(
        kernel,
        out_shape=jax.ShapeDtypeStruct((nb * tb, nk * _LANES), jnp.float32),
        grid_spec=pltpu.PrefetchScalarGridSpec(
            num_scalar_prefetch=0,
            grid=(nb, nk),
            in_specs=[
                pl.BlockSpec((tb, td), lambda i, k: (i, k)),
                pl.BlockSpec((tb, td), lambda i, k: (i, k)),
            ],
            out_specs=pl.BlockSpec((tb, _LANES), lambda i, k: (i, k)),
        ),
        compiler_params=pltpu.CompilerParams(
            dimension_semantics=("parallel", "parallel"),
            vmem_limit_bytes=32 * 1024 * 1024,   # fits v7x's 64 MiB with headroom
        ),
    )(x2, t2)

    # Tiny final combine in plain JAX (slice away padded batch rows, sum over k).
    parts = partials.reshape(nb * tb, nk, _LANES)[:B]
    inter = jnp.sum(parts[:, :, 0], axis=1)
    denom = jnp.sum(parts[:, :, 1], axis=1)
    bce_rows = jnp.sum(parts[:, :, 2], axis=1)

    dice_coef = 2.0 * (inter + smooth) / (denom + smooth)
    dice_loss = 1.0 - jnp.sum(dice_coef) / B
    bce_loss = jnp.sum(bce_rows) / (B * D)
    # Weights exactly as in the original forward():
    #   bce_weight * dice_loss + dice_weight * bce_loss   (intentionally "crossed")
    return bce_weight * dice_loss + dice_weight * bce_loss


def _reference_loss(x, target, bce_weight=0.5, dice_weight=0.5, smooth=1.0):
    """Pure-JAX reference mirroring the PyTorch module (sigmoid -> BCELoss path)."""
    B = x.shape[0]
    p = jax.nn.sigmoid(x.astype(jnp.float32))
    t = target.astype(jnp.float32)
    pf = p.reshape(B, -1)
    tf = t.reshape(B, -1)
    inter = jnp.sum(pf * tf, axis=1)
    dice_coef = 2.0 * (inter + smooth) / (jnp.sum(pf, axis=1) + jnp.sum(tf, axis=1) + smooth)
    dice_loss = 1.0 - jnp.sum(dice_coef) / B
    log_p = jnp.maximum(jnp.log(pf), -100.0)
    log_1mp = jnp.maximum(jnp.log(1.0 - pf), -100.0)
    bce_loss = -jnp.mean(tf * log_p + (1.0 - tf) * log_1mp)
    return bce_weight * dice_loss + dice_weight * bce_loss


if __name__ == "__main__":
    key = jax.random.PRNGKey(0)
    kx, kt = jax.random.split(key)
    # NCHW like the PyTorch conv/segmentation convention
    x = jax.random.normal(kx, (2, 4, 16, 16), dtype=jnp.float32)
    target = jax.random.bernoulli(kt, 0.5, (2, 4, 16, 16)).astype(jnp.float32)

    loss = dice_bce_loss(x, target)
    loss = jax.block_until_ready(loss)

    ref = _reference_loss(x, target)
    np.testing.assert_allclose(np.asarray(loss), np.asarray(ref), rtol=1e-5, atol=1e-5)

    print("KERNEL_OK")
</pallas_src>

<mosaic_0001>
module attributes {stable_mosaic.version = 11 : i64} {
  func.func @kernel(%arg0: i32, %arg1: i32, %arg2: memref<2x1024xf32, #tpu.memory_space<vmem>>, %arg3: memref<2x1024xf32, #tpu.memory_space<vmem>>, %arg4: memref<2x128xf32, #tpu.memory_space<vmem>>) attributes {dimension_semantics = [#tpu.dimension_semantics<parallel>, #tpu.dimension_semantics<parallel>], iteration_bounds = array<i64: 1, 1>, scalar_prefetch = 0 : i64, scratch_operands = 0 : i64, tpu.core_type = #tpu.core_type<tc>, window_params = [{transform_indices = @transform_0, window_bounds = array<i64: 2, 1024>}, {transform_indices = @transform_1, window_bounds = array<i64: 2, 1024>}, {transform_indices = @transform_2, window_bounds = array<i64: 2, 128>}]} {
    %cst = arith.constant 0.000000e+00 : f32
    %0 = vector.broadcast %cst : f32 to vector<2x512xf32>
    %c0_i32 = arith.constant 0 : i32
    %c2_i32 = arith.constant 2 : i32
    %1 = arith.addi %c0_i32, %c2_i32 : i32
    %c1_i32 = arith.constant 1 : i32
    %2:3 = scf.for %arg5 = %c0_i32 to %1 step %c1_i32 iter_args(%arg6 = %0, %arg7 = %0, %arg8 = %0) -> (vector<2x512xf32>, vector<2x512xf32>, vector<2x512xf32>)  : i32 {
      %c512_i32 = arith.constant 512 : i32
      %27 = arith.muli %arg5, %c512_i32 : i32
      %28 = tpu.assume_multiple %27, 512 : i32
      %c0_9 = arith.constant 0 : index
      %29 = arith.index_cast %28 : i32 to index
      %30 = vector.load %arg2[%c0_9, %29] : memref<2x1024xf32, #tpu.memory_space<vmem>>, vector<2x512xf32>
      %c0_10 = arith.constant 0 : index
      %31 = arith.index_cast %28 : i32 to index
      %32 = vector.load %arg3[%c0_10, %31] : memref<2x1024xf32, #tpu.memory_space<vmem>>, vector<2x512xf32>
      %cst_11 = arith.constant 0.000000e+00 : f32
      %33 = vector.broadcast %cst_11 : f32 to vector<2x512xf32>
      %34 = arith.maximumf %30, %33 : vector<2x512xf32>
      %35 = math.absf %30 : vector<2x512xf32>
      %cst_12 = arith.constant 0.000000e+00 : f32
      %36 = vector.broadcast %cst_12 : f32 to vector<2x512xf32>
      %37 = arith.subf %36, %35 : vector<2x512xf32>
      %38 = math.exp %37 : vector<2x512xf32>
      %cst_13 = arith.constant 1.000000e+00 : f32
      %39 = vector.broadcast %cst_13 : f32 to vector<2x512xf32>
      %40 = arith.addf %39, %38 : vector<2x512xf32>
      %41 = math.log %40 : vector<2x512xf32>
      %42 = arith.addf %34, %41 : vector<2x512xf32>
      %43 = arith.subf %30, %42 : vector<2x512xf32>
      %cst_14 = arith.constant -1.000000e+02 : f32
      %44 = vector.broadcast %cst_14 : f32 to vector<2x512xf32>
      %45 = arith.maximumf %43, %44 : vector<2x512xf32>
      %cst_15 = arith.constant 0.000000e+00 : f32
      %46 = vector.broadcast %cst_15 : f32 to vector<2x512xf32>
      %47 = arith.subf %46, %42 : vector<2x512xf32>
      %cst_16 = arith.constant -1.000000e+02 : f32
      %48 = vector.broadcast %cst_16 : f32 to vector<2x512xf32>
      %49 = arith.maximumf %47, %48 : vector<2x512xf32>
      %50 = arith.subf %30, %42 : vector<2x512xf32>
      %51 = math.exp %50 : vector<2x512xf32>
      %52 = arith.mulf %51, %32 : vector<2x512xf32>
      %53 = arith.addf %51, %32 : vector<2x512xf32>
      %54 = arith.mulf %32, %45 : vector<2x512xf32>
      %cst_17 = arith.constant 1.000000e+00 : f32
      %55 = vector.broadcast %cst_17 : f32 to vector<2x512xf32>
      %56 = arith.subf %55, %32 : vector<2x512xf32>
      %57 = arith.mulf %56, %49 : vector<2x512xf32>
      %58 = arith.addf %54, %57 : vector<2x512xf32>
      %cst_18 = arith.constant 0.000000e+00 : f32
      %59 = vector.broadcast %cst_18 : f32 to vector<2x512xf32>
      %60 = arith.subf %59, %58 : vector<2x512xf32>
      %61 = arith.addf %arg6, %52 : vector<2x512xf32>
      %62 = arith.addf %arg7, %53 : vector<2x512xf32>
      %63 = arith.addf %arg8, %60 : vector<2x512xf32>
      scf.yield %61, %62, %63 : vector<2x512xf32>, vector<2x512xf32>, vector<2x512xf32>
    }
    %c2_i32_0 = arith.constant 2 : i32
    %cst_1 = arith.constant dense<0.000000e+00> : vector<2xf32>
    %3 = vector.multi_reduction <add>, %2#0, %cst_1 [1] : vector<2x512xf32> to vector<2xf32>
    %4 = vector.shape_cast %3 : vector<2xf32> to vector<2x1xf32>
    %cst_2 = arith.constant dense<0.000000e+00> : vector<2xf32>
    %5 = vector.multi_reduction <add>, %2#1, %cst_2 [1] : vector<2x512xf32> to vector<2xf32>
    %6 = vector.shape_cast %5 : vector<2xf32> to vector<2x1xf32>
    %cst_3 = arith.constant dense<0.000000e+00> : vector<2xf32>
    %7 = vector.multi_reduction <add>, %2#2, %cst_3 [1] : vector<2x512xf32> to vector<2xf32>
    %8 = vector.shape_cast %7 : vector<2xf32> to vector<2x1xf32>
    %9 = tpu.iota {dimensions = array<i32: 1>} : vector<2x128xi32>
    %c0_i32_4 = arith.constant 0 : i32
    %10 = vector.broadcast %c0_i32_4 : i32 to vector<2x128xi32>
    %11 = arith.cmpi eq, %9, %10 : vector<2x128xi32>
    %c1_i32_5 = arith.constant 1 : i32
    %12 = vector.broadcast %c1_i32_5 : i32 to vector<2x128xi32>
    %13 = arith.cmpi eq, %9, %12 : vector<2x128xi32>
    %c2_i32_6 = arith.constant 2 : i32
    %14 = vector.broadcast %c2_i32_6 : i32 to vector<2x128xi32>
    %15 = arith.cmpi eq, %9, %14 : vector<2x128xi32>
    %cst_7 = arith.constant 0.000000e+00 : f32
    %16 = vector.shape_cast %8 : vector<2x1xf32> to vector<2x1xf32>
    %17 = vector.broadcast %16 : vector<2x1xf32> to vector<2x128xf32>
    %18 = vector.broadcast %cst_7 : f32 to vector<2x128xf32>
    %19 = arith.select %15, %17, %18 : vector<2x128xi1>, vector<2x128xf32>
    %20 = vector.shape_cast %6 : vector<2x1xf32> to vector<2x1xf32>
    %21 = vector.broadcast %20 : vector<2x1xf32> to vector<2x128xf32>
    %22 = arith.select %13, %21, %19 : vector<2x128xi1>, vector<2x128xf32>
    %23 = vector.shape_cast %4 : vector<2x1xf32> to vector<2x1xf32>
    %24 = vector.broadcast %23 : vector<2x1xf32> to vector<2x128xf32>
    %25 = arith.select %11, %24, %22 : vector<2x128xi1>, vector<2x128xf32>
    %c0 = arith.constant 0 : index
    %c0_8 = arith.constant 0 : index
    %26 = vector.load %arg4[%c0, %c0_8] : memref<2x128xf32, #tpu.memory_space<vmem>>, vector<2x128xf32>
    tpu.vector_store %arg4[%c0, %c0_8], %25 {strides = array<i32>} : memref<2x128xf32, #tpu.memory_space<vmem>>, vector<2x128xf32>,
    return
  }
  func.func @transform_0(%arg0: i32, %arg1: i32) -> (i32, i32) {
    %c0_i32 = arith.constant 0 : i32
    return %arg0, %arg1 : i32, i32
  }
  func.func @transform_1(%arg0: i32, %arg1: i32) -> (i32, i32) {
    %c0_i32 = arith.constant 0 : i32
    return %arg0, %arg1 : i32, i32
  }
  func.func @transform_2(%arg0: i32, %arg1: i32) -> (i32, i32) {
    %c0_i32 = arith.constant 0 : i32
    return %arg0, %arg1 : i32, i32
  }
}

</mosaic_0001>

<llo_original>
// kernel: tpu_custom_call.1
$region0: #{tpu_custom_call.1}
  #allocation0 [shape = 'u32[]', space=smem, size = 0x4, offset = 0x4, fixed_abs, tag = 'smem constant byte address 0x4 - core index']
  #allocation1 [shape = 'u32[144,128]{1,0:T(1,128)}', space=vmem, size = 0x12000, scoped, tag = 'internal scratch']
  %s0 = inlined_call_operand.hbm [shape: f32[2,1024], index: 0, kind: input, shape index: {}]
  %s1 = inlined_call_operand.hbm [shape: f32[2,1024], index: 1, kind: input, shape index: {}]
  %s2 = inlined_call_operand.hbm [shape: f32[2,128], index: 2, kind: output, shape index: {}]
  %s3 = sld [smem:[#allocation0]]
  $region33: #{tpu_custom_call.1} parent=0
    _
  %s5 = ssub.s32 1, %s3
  %s6 = scalar_select 0, %s5, %s3
  $region1: #{tpu_custom_call.1} parent=0
    #allocation2 [shape = 'u8[8192]{0}', space=vmem, size = 0x2000, scoped, tag = 'input window, operand 0, single buffered']
    #allocation3 [shape = 's32[1]{0}', space=sflag, size = 0x4, scoped, tag = 'scoped memory for tpu_custom_call.1']
    #allocation4 [shape = 's32[1]{0}', space=sflag, size = 0x4, scoped, tag = 'scoped memory for tpu_custom_call.1']
    #allocation5 [shape = 'u8[8192]{0}', space=vmem, size = 0x2000, scoped, tag = 'input window, operand 1, single buffered']
    #allocation6 [shape = 's32[1]{0}', space=sflag, size = 0x4, scoped, tag = 'scoped memory for tpu_custom_call.1']
    #allocation7 [shape = 'u8[1024]{0}', space=vmem, size = 0x400, scoped, tag = 'output window, operand 0, single buffered']
    %7 = vsyncpa [#allocation3], 0
    %8 = vsyncpa [#allocation6], 0
    %9 = vsyncpa [#allocation4], 0
    // Predicated region
    $region2: #{tpu_custom_call.1} parent=1 // pred_check
      _
    $region3: #{tpu_custom_call.1} parent=1 // pred_check_branch
      %11 = sbr.rel (0) target = $region5
    $region4: #{tpu_custom_call.1} parent=1 // pred_region
      %s13 = ssub.s32 256, 256
      %14 = vsyncadd [#allocation3], %s13
      %s16 = sshll.u32 [#allocation2], 4
      %s17 = int_to_ptr.vmem [resolvable:$true] %s16
      %19 = dma.hbm_to_vmem [thread:$0]  %s0, 256, %s17, [#allocation3]
    $region5: #{tpu_custom_call.1} parent=1 // pred_fallthru
      _
    // Predicated region
    $region6: #{tpu_custom_call.1} parent=1 // pred_check
      _
    $region7: #{tpu_custom_call.1} parent=1 // pred_check_branch
      %21 = sbr.rel (0) target = $region9
    $region8: #{tpu_custom_call.1} parent=1 // pred_region
      %s23 = ssub.s32 256, 256
      %24 = vsyncadd [#allocation6], %s23
      %s26 = sshll.u32 [#allocation5], 4
      %s27 = int_to_ptr.vmem [resolvable:$true] %s26
      %29 = dma.hbm_to_vmem [thread:$0]  %s1, 256, %s27, [#allocation6]
    $region9: #{tpu_custom_call.1} parent=1 // pred_fallthru
      _
    // Predicated region
    $region10: #{tpu_custom_call.1} parent=1 // pred_check
      _
    $region11: #{tpu_custom_call.1} parent=1 // pred_check_branch
      %31 = sbr.rel (0) target = $region13
    $region12: #{tpu_custom_call.1} parent=1 // pred_region
      %32 = dma.done [#allocation3], 256
    $region13: #{tpu_custom_call.1} parent=1 // pred_fallthru
      _
    // Predicated region
    $region14: #{tpu_custom_call.1} parent=1 // pred_check
      _
    $region15: #{tpu_custom_call.1} parent=1 // pred_check_branch
      %34 = sbr.rel (0) target = $region17
    $region16: #{tpu_custom_call.1} parent=1 // pred_region
      %35 = dma.done [#allocation6], 256
    $region17: #{tpu_custom_call.1} parent=1 // pred_fallthru
      _
    loop: start=0, step=1, limit=2
    $region18: #{tpu_custom_call.1} parent=1 // loop_pre_header
      _
    $region19: #{tpu_custom_call.1} parent=1 // loop_header
      %s37 = sphi 0, %s41
      %p38 = scmp.ge.s32.totalorder %s37, 2
      %v42 = vphi 0.0, %v76
      %v43 = vphi 0.0, %v77
      %v44 = vphi 0.0, %v78
    $region20: #{tpu_custom_call.1} parent=1 // loop_header_branch
      %40 = sbr.rel (%p38) target = $region24
    $region21: #{tpu_custom_call.1} parent=1 // loop_body
      %s45 = smul.u32 %s37, 512
      %s46 = sshra.s32 %s45, 7
      %s47 = sand.u32 %s45, 127
      %s48 = smul.addr %s46, 2
      %s49 = scalar_lea.vmem [#allocation2], %s48
      %v50 = vld [vmem:[%s49] sm:$0xff]
      %s51 = smul.addr %s46, 2
      %s52 = scalar_lea.vmem [#allocation5], %s51
      %v53 = vld [vmem:[%s52] sm:$0xff]
      %v54 = vmax.f32 %v50, 0.0
      %v55 = vand.u32 2147483647, %v50
      %v56 = vsub.f32 0.0, %v55
      %v57 = vmul.f32 %v56, 1.442695
      %v58 = vpow.pop %v57
      %v59 = vadd.f32 %v58, 1.0
      %v60 = vlog2.pop %v59
      %v61 = vmul.f32 %v60, 0.6931472
      %v62 = vadd.f32 %v54, %v61
      %v63 = vsub.f32 %v50, %v62
      %v64 = vmax.f32 %v63, -100.0
      %v65 = vsub.f32 0.0, %v62
      %v66 = vmax.f32 %v65, -100.0
      %v67 = vmul.f32 %v63, 1.442695
      %v68 = vpow.pop %v67
      %v69 = vmul.f32 %v68, %v53
      %v70 = vadd.f32 %v68, %v53
      %v71 = vmul.f32 %v53, %v64
      %v72 = vsub.f32 1.0, %v53
      %v73 = vmul.f32 %v72, %v66
      %v74 = vadd.f32 %v71, %v73
      %v75 = vsub.f32 0.0, %v74
      %v76 = vadd.f32 %v42, %v69
      %v77 = vadd.f32 %v43, %v70
      %v78 = vadd.f32 %v44, %v75
    $region22: #{tpu_custom_call.1} parent=1 // loop_footer
      %s41 = sadd.s32 1, %s37
    $region23: #{tpu_custom_call.1} parent=1 // loop_footer_branch
      %36 = sbr.rel target = $region19
    $region24: #{tpu_custom_call.1} parent=1 // loop_exit
      _
    %v80 = vcombine.high %v42, %v42
    %v82 = vunpack.c.l.s4 1983009808
    %v83 = vunpack.c.0.s8 %v82
    %v84 = vlaneseq
    %v85 = vshrl.u32 %v84, 7
    %v86 = vsub.s32 %v83, %v85
    %v87 = vrot.slane %v42, %v86
    %v89 = vunpack.c.l.s4 1983009808
    %v90 = vunpack.c.0.s8 %v89
    %v91 = vlaneseq
    %v92 = vshrl.u32 %v91, 7
    %v93 = vsub.s32 %v90, %v92
    %v94 = vrot.slane %v80, %v93
    %v95 = vcombine.high %v87, %v87
    %v96 = vcombine.high %v94, %v94
    %vm101 = vcmask 1041408
    %v102 = vsel %vm101, %v87, 0.0
    %v103 = vsel %vm101, %v95, 0.0
    %v104 = vadd.f32 %v102, %v103
    %v105 = vsel %vm101, %v94, 0.0
    %v106 = vadd.f32 %v104, %v105
    %v107 = vsel %vm101, %v96, 0.0
    %v108 = vadd.f32 %v106, %v107
    %109 = vadd.xlane.f32.xlu0 %v108
    %v110 = vpop.xlane.xlu0 %109
    %v112 = vcombine.high %v43, %v43
    %v114 = vunpack.c.l.s4 1983009808
    %v115 = vunpack.c.0.s8 %v114
    %v116 = vlaneseq
    %v117 = vshrl.u32 %v116, 7
    %v118 = vsub.s32 %v115, %v117
    %v119 = vrot.slane %v43, %v118
    %v121 = vunpack.c.l.s4 1983009808
    %v122 = vunpack.c.0.s8 %v121
    %v123 = vlaneseq
    %v124 = vshrl.u32 %v123, 7
    %v125 = vsub.s32 %v122, %v124
    %v126 = vrot.slane %v112, %v125
    %v127 = vcombine.high %v119, %v119
    %v128 = vcombine.high %v126, %v126
    %v133 = vsel %vm101, %v119, 0.0
    %v134 = vsel %vm101, %v127, 0.0
    %v135 = vadd.f32 %v133, %v134
    %v136 = vsel %vm101, %v126, 0.0
    %v137 = vadd.f32 %v135, %v136
    %v138 = vsel %vm101, %v128, 0.0
    %v139 = vadd.f32 %v137, %v138
    %140 = vadd.xlane.f32.xlu0 %v139
    %v141 = vpop.xlane.xlu0 %140
    %v143 = vcombine.high %v44, %v44
    %v145 = vunpack.c.l.s4 1983009808
    %v146 = vunpack.c.0.s8 %v145
    %v147 = vlaneseq
    %v148 = vshrl.u32 %v147, 7
    %v149 = vsub.s32 %v146, %v148
    %v150 = vrot.slane %v44, %v149
    %v152 = vunpack.c.l.s4 1983009808
    %v153 = vunpack.c.0.s8 %v152
    %v154 = vlaneseq
    %v155 = vshrl.u32 %v154, 7
    %v156 = vsub.s32 %v153, %v155
    %v157 = vrot.slane %v143, %v156
    %v158 = vcombine.high %v150, %v150
    %v159 = vcombine.high %v157, %v157
    %v164 = vsel %vm101, %v150, 0.0
    %v165 = vsel %vm101, %v158, 0.0
    %v166 = vadd.f32 %v164, %v165
    %v167 = vsel %vm101, %v157, 0.0
    %v168 = vadd.f32 %v166, %v167
    %v169 = vsel %vm101, %v159, 0.0
    %v170 = vadd.f32 %v168, %v169
    %171 = vadd.xlane.f32.xlu0 %v170
    %v172 = vpop.xlane.xlu0 %171
    %v173 = vlaneseq
    %v174 = vand.u32 %v173, 127
    %vm175 = vcmp.eq.s32.totalorder %v174, 0
    %vm176 = vcmp.eq.s32.totalorder %v174, 1
    %vm177 = vcmp.eq.s32.totalorder %v174, 2
    %v178 = vsel %vm177, %v172, 0.0
    %v179 = vsel %vm176, %v141, %v178
    %v180 = vsel %vm175, %v110, %v179
    %181 = vst [vmem:[#allocation7] sm:$0x3] %v180
    // Predicated region
    $region25: #{tpu_custom_call.1} parent=1 // pred_check
      _
    $region26: #{tpu_custom_call.1} parent=1 // pred_check_branch
      %183 = sbr.rel (0) target = $region28
    $region27: #{tpu_custom_call.1} parent=1 // pred_region
      %s185 = ssub.s32 32, 32
      %186 = vsyncadd [#allocation4], %s185
      %s188 = sshll.u32 [#allocation7], 4
      %s189 = int_to_ptr.vmem [resolvable:$true] %s188
      %191 = dma.vmem_to_hbm [thread:$0]  %s189, 32, %s2, [#allocation4]
    $region28: #{tpu_custom_call.1} parent=1 // pred_fallthru
      _
    // Predicated region
    $region29: #{tpu_custom_call.1} parent=1 // pred_check
      _
    $region30: #{tpu_custom_call.1} parent=1 // pred_check_branch
      %193 = sbr.rel (0) target = $region32
    $region31: #{tpu_custom_call.1} parent=1 // pred_region
      %194 = dma.done [#allocation4], 32
    $region32: #{tpu_custom_call.1} parent=1 // pred_fallthru
      _
    %195 = vsyncpa [#allocation3], 1
    %196 = vsyncpa [#allocation6], 1
    %197 = vsyncpa [#allocation4], 1

</llo_original>
